<compile_context>
chip_gen: v7x
topology: tpu7x:2x2x1
jax: 0.10.0
libtpu: 0.0.40
codegen_flags: <defaults>
</compile_context>

<pallas_src>
import functools
import math

import jax
import jax.numpy as jnp
from jax.experimental import pallas as pl
from jax.experimental.pallas import tpu as pltpu


def _round_up(n, m):
    return ((n + m - 1) // m) * m


def _actor_critic_kernel(x_ref, w1_ref, b1_ref, w2_ref, b2_ref, wh_ref, bh_ref, out_ref):
    # x_ref: (input_dim, TILE_B) -- batch on the lane axis.
    x = x_ref[...]

    # layer1: h1^T = W1 @ x^T + b1, ReLU          -> (32, TILE_B)
    h1 = jnp.dot(w1_ref[...], x, preferred_element_type=jnp.float32) + b1_ref[...]
    h1 = jnp.maximum(h1, 0.0)

    # layer2: h2^T = W2 @ h1^T + b2, ReLU         -> (16, TILE_B)
    h2 = jnp.dot(w2_ref[...], h1, preferred_element_type=jnp.float32) + b2_ref[...]
    h2 = jnp.maximum(h2, 0.0)

    # fused heads: [mu; sigma; value]^T = W_h @ h2^T + b_h  -> (head_dim, TILE_B)
    out = jnp.dot(wh_ref[...], h2, preferred_element_type=jnp.float32) + bh_ref[...]
    out_ref[...] = out.astype(out_ref.dtype)


@functools.partial(jax.jit, static_argnames=("tile_b",))
def actor_critic_forward(x, params, *, tile_b=2048):
    """Forward pass of ActorCritic.

    x: (B, input_dim) float32.
    params: PyTorch-native layouts -- w*: (out_features, in_features), b*: (out_features,).
    Returns (mu, sigma, value) with shapes (B, A), (B, A), (B, C).
    """
    B, input_dim = x.shape
    actor_shape = params["w_mu"].shape[0]
    critic_shape = params["w_c"].shape[0]
    head_dim = 2 * actor_shape + critic_shape
    h1_dim = params["w1"].shape[0]   # 32
    h2_dim = params["w2"].shape[0]   # 16

    # Fuse the three head weights/biases into one matmul (one MXU push, one store).
    w_heads = jnp.concatenate([params["w_mu"], params["w_sigma"], params["w_c"]], axis=0)
    b_heads = jnp.concatenate(
        [params["b_mu"], params["b_sigma"], params["b_c"]], axis=0
    ).reshape(head_dim, 1)
    b1 = params["b1"].reshape(h1_dim, 1)
    b2 = params["b2"].reshape(h2_dim, 1)

    # Batch tiling: batch lives on the lane axis; pad to a multiple of the tile.
    # tile_b default 2048 is a multiple of both 128 (v5e MXU/lane) and 256 (v6e/v7x MXU).
    tile = min(tile_b, _round_up(max(B, 1), 128))
    b_pad = _round_up(max(B, 1), tile)
    xt = jnp.zeros((input_dim, b_pad), x.dtype).at[:, :B].set(x.T)

    grid = (b_pad // tile,)
    const = lambda i: (0, 0)

    flops = 2 * b_pad * (input_dim * h1_dim + h1_dim * h2_dim + h2_dim * head_dim)
    bytes_accessed = 4 * (
        xt.size + b_pad * head_dim
        + w_heads.size + b_heads.size
        + params["w1"].size + params["w2"].size + b1.size + b2.size
    )

    out = pl.pallas_call(
        _actor_critic_kernel,
        out_shape=jax.ShapeDtypeStruct((head_dim, b_pad), jnp.float32),
        grid_spec=pltpu.PrefetchScalarGridSpec(
            num_scalar_prefetch=0,
            grid=grid,
            in_specs=[
                pl.BlockSpec((input_dim, tile), lambda i: (0, i)),   # x tile (pipelined)
                pl.BlockSpec((h1_dim, input_dim), const),            # W1 (VMEM resident)
                pl.BlockSpec((h1_dim, 1), const),                    # b1
                pl.BlockSpec((h2_dim, h1_dim), const),               # W2
                pl.BlockSpec((h2_dim, 1), const),                    # b2
                pl.BlockSpec((head_dim, h2_dim), const),             # fused head weights
                pl.BlockSpec((head_dim, 1), const),                  # fused head biases
            ],
            out_specs=pl.BlockSpec((head_dim, tile), lambda i: (0, i)),
        ),
        compiler_params=pltpu.CompilerParams(
            dimension_semantics=("parallel",),
        ),
        cost_estimate=pl.CostEstimate(
            flops=flops, transcendentals=0, bytes_accessed=bytes_accessed
        ),
    )(xt, params["w1"], b1, params["w2"], b2, w_heads, b_heads)

    out_t = out[:, :B].T                              # (B, head_dim)
    mu = out_t[:, :actor_shape]
    sigma = out_t[:, actor_shape:2 * actor_shape]
    value = out_t[:, 2 * actor_shape:]
    return mu, sigma, value


def actor_critic_reference(x, params):
    """Plain-JAX reference matching the PyTorch forward (raw affine sigma, as in the module)."""
    h1 = jnp.maximum(x @ params["w1"].T + params["b1"], 0.0)
    h2 = jnp.maximum(h1 @ params["w2"].T + params["b2"], 0.0)
    mu = h2 @ params["w_mu"].T + params["b_mu"]
    sigma = h2 @ params["w_sigma"].T + params["b_sigma"]
    value = h2 @ params["w_c"].T + params["b_c"]
    return mu, sigma, value


def init_params(key, input_dim, actor_shape, critic_shape):
    """Deterministic init mimicking torch.nn.Linear defaults; PyTorch-native layouts."""
    def linear(key, fan_in, fan_out):
        kw, kb = jax.random.split(key)
        bound = 1.0 / math.sqrt(fan_in)
        w = jax.random.uniform(kw, (fan_out, fan_in), jnp.float32, -bound, bound)
        b = jax.random.uniform(kb, (fan_out,), jnp.float32, -bound, bound)
        return w, b

    k1, k2, k3, k4, k5 = jax.random.split(key, 5)
    w1, b1 = linear(k1, input_dim, 32)
    w2, b2 = linear(k2, 32, 16)
    w_mu, b_mu = linear(k3, 16, actor_shape)
    w_sigma, b_sigma = linear(k4, 16, actor_shape)
    w_c, b_c = linear(k5, 16, critic_shape)
    return dict(
        w1=w1, b1=b1, w2=w2, b2=b2,
        w_mu=w_mu, b_mu=b_mu,
        w_sigma=w_sigma, b_sigma=b_sigma,
        w_c=w_c, b_c=b_c,
    )


if __name__ == "__main__":
    key = jax.random.PRNGKey(0)
    k_x, k_x2, k_p = jax.random.split(key, 3)

    input_dim = 4      # input_shape[0]
    actor_shape = 2
    critic_shape = 1
    params = init_params(k_p, input_dim, actor_shape, critic_shape)

    # Small-batch check (single grid step, padded to one lane tile).
    x_small = jax.random.normal(k_x, (2, input_dim), jnp.float32)
    mu, sigma, value = actor_critic_forward(x_small, params)
    jax.block_until_ready((mu, sigma, value))
    mu_r, sig_r, v_r = actor_critic_reference(x_small, params)
    assert mu.shape == (2, actor_shape) and sigma.shape == (2, actor_shape) and value.shape == (2, critic_shape)
    assert jnp.allclose(mu, mu_r, atol=1e-5)
    assert jnp.allclose(sigma, sig_r, atol=1e-5)
    assert jnp.allclose(value, v_r, atol=1e-5)

    # Multi-tile check (B not divisible by the tile -> padded last tile + pipelined grid).
    x_big = jax.random.normal(k_x2, (300, input_dim), jnp.float32)
    mu2, sigma2, value2 = actor_critic_forward(x_big, params, tile_b=128)
    jax.block_until_ready((mu2, sigma2, value2))
    mu2_r, sig2_r, v2_r = actor_critic_reference(x_big, params)
    assert jnp.allclose(mu2, mu2_r, atol=1e-5)
    assert jnp.allclose(sigma2, sig2_r, atol=1e-5)
    assert jnp.allclose(value2, v2_r, atol=1e-5)

    # NOTE: as in the original PyTorch module, sigma is the raw affine output
    # (no softplus/exp) -- any positivity transform belongs to the caller.
    print("KERNEL_OK")
</pallas_src>

<mosaic_0001>
module attributes {stable_mosaic.version = 11 : i64} {
  func.func @_actor_critic_kernel(%arg0: i32, %arg1: memref<4x128xf32, #tpu.memory_space<vmem>>, %arg2: memref<32x4xf32, #tpu.memory_space<vmem>>, %arg3: memref<32x1xf32, #tpu.memory_space<vmem>>, %arg4: memref<16x32xf32, #tpu.memory_space<vmem>>, %arg5: memref<16x1xf32, #tpu.memory_space<vmem>>, %arg6: memref<5x16xf32, #tpu.memory_space<vmem>>, %arg7: memref<5x1xf32, #tpu.memory_space<vmem>>, %arg8: memref<5x128xf32, #tpu.memory_space<vmem>>) attributes {dimension_semantics = [#tpu.dimension_semantics<parallel>], iteration_bounds = array<i64: 1>, scalar_prefetch = 0 : i64, scratch_operands = 0 : i64, tpu.core_type = #tpu.core_type<tc>, window_params = [{transform_indices = @transform_0, window_bounds = array<i64: 4, 128>}, {pipeline_mode = #tpu.pipeline_mode<synchronous>, transform_indices = @transform_1, window_bounds = array<i64: 32, 4>}, {pipeline_mode = #tpu.pipeline_mode<synchronous>, transform_indices = @transform_2, window_bounds = array<i64: 32, 1>}, {pipeline_mode = #tpu.pipeline_mode<synchronous>, transform_indices = @transform_3, window_bounds = array<i64: 16, 32>}, {pipeline_mode = #tpu.pipeline_mode<synchronous>, transform_indices = @transform_4, window_bounds = array<i64: 16, 1>}, {pipeline_mode = #tpu.pipeline_mode<synchronous>, transform_indices = @transform_5, window_bounds = array<i64: 5, 16>}, {pipeline_mode = #tpu.pipeline_mode<synchronous>, transform_indices = @transform_6, window_bounds = array<i64: 5, 1>}, {transform_indices = @transform_7, window_bounds = array<i64: 5, 128>}]} {
    %c0 = arith.constant 0 : index
    %c0_0 = arith.constant 0 : index
    %0 = vector.load %arg1[%c0, %c0_0] : memref<4x128xf32, #tpu.memory_space<vmem>>, vector<4x128xf32>
    %c0_1 = arith.constant 0 : index
    %c0_2 = arith.constant 0 : index
    %1 = vector.load %arg2[%c0_1, %c0_2] : memref<32x4xf32, #tpu.memory_space<vmem>>, vector<32x4xf32>
    %cst = arith.constant dense<0.000000e+00> : vector<32x128xf32>
    %2 = tpu.matmul %1, %0, %cst {dimension_numbers = #tpu.dot_dimension_numbers<[1], [0], [0], [1], [0, 0, 1, 1], [], []>} : vector<32x4xf32>, vector<4x128xf32>, vector<32x128xf32> -> vector<32x128xf32>
    %c0_3 = arith.constant 0 : index
    %c0_4 = arith.constant 0 : index
    %3 = vector.load %arg3[%c0_3, %c0_4] : memref<32x1xf32, #tpu.memory_space<vmem>>, vector<32x1xf32>
    %4 = vector.broadcast %3 : vector<32x1xf32> to vector<32x128xf32>
    %5 = arith.addf %2, %4 : vector<32x128xf32>
    %cst_5 = arith.constant 0.000000e+00 : f32
    %6 = vector.broadcast %cst_5 : f32 to vector<32x128xf32>
    %7 = arith.maximumf %5, %6 : vector<32x128xf32>
    %c0_6 = arith.constant 0 : index
    %c0_7 = arith.constant 0 : index
    %8 = vector.load %arg4[%c0_6, %c0_7] : memref<16x32xf32, #tpu.memory_space<vmem>>, vector<16x32xf32>
    %cst_8 = arith.constant dense<0.000000e+00> : vector<16x128xf32>
    %9 = tpu.matmul %8, %7, %cst_8 {dimension_numbers = #tpu.dot_dimension_numbers<[1], [0], [0], [1], [0, 0, 1, 1], [], []>} : vector<16x32xf32>, vector<32x128xf32>, vector<16x128xf32> -> vector<16x128xf32>
    %c0_9 = arith.constant 0 : index
    %c0_10 = arith.constant 0 : index
    %10 = vector.load %arg5[%c0_9, %c0_10] : memref<16x1xf32, #tpu.memory_space<vmem>>, vector<16x1xf32>
    %11 = vector.broadcast %10 : vector<16x1xf32> to vector<16x128xf32>
    %12 = arith.addf %9, %11 : vector<16x128xf32>
    %cst_11 = arith.constant 0.000000e+00 : f32
    %13 = vector.broadcast %cst_11 : f32 to vector<16x128xf32>
    %14 = arith.maximumf %12, %13 : vector<16x128xf32>
    %c0_12 = arith.constant 0 : index
    %c0_13 = arith.constant 0 : index
    %15 = vector.load %arg6[%c0_12, %c0_13] : memref<5x16xf32, #tpu.memory_space<vmem>>, vector<5x16xf32>
    %cst_14 = arith.constant dense<0.000000e+00> : vector<5x128xf32>
    %16 = tpu.matmul %15, %14, %cst_14 {dimension_numbers = #tpu.dot_dimension_numbers<[1], [0], [0], [1], [0, 0, 1, 1], [], []>} : vector<5x16xf32>, vector<16x128xf32>, vector<5x128xf32> -> vector<5x128xf32>
    %c0_15 = arith.constant 0 : index
    %c0_16 = arith.constant 0 : index
    %17 = vector.load %arg7[%c0_15, %c0_16] : memref<5x1xf32, #tpu.memory_space<vmem>>, vector<5x1xf32>
    %18 = vector.broadcast %17 : vector<5x1xf32> to vector<5x128xf32>
    %19 = arith.addf %16, %18 : vector<5x128xf32>
    %c0_17 = arith.constant 0 : index
    %c0_18 = arith.constant 0 : index
    %20 = vector.load %arg8[%c0_17, %c0_18] : memref<5x128xf32, #tpu.memory_space<vmem>>, vector<5x128xf32>
    tpu.vector_store %arg8[%c0_17, %c0_18], %19 {strides = array<i32>} : memref<5x128xf32, #tpu.memory_space<vmem>>, vector<5x128xf32>,
    return
  }
  func.func @transform_0(%arg0: i32) -> (i32, i32) {
    %c0_i32 = arith.constant 0 : i32
    %c0_i32_0 = arith.constant 0 : i32
    return %c0_i32, %arg0 : i32, i32
  }
  func.func @transform_1(%arg0: i32) -> (i32, i32) {
    %c0_i32 = arith.constant 0 : i32
    %c0_i32_0 = arith.constant 0 : i32
    %c0_i32_1 = arith.constant 0 : i32
    return %c0_i32, %c0_i32_0 : i32, i32
  }
  func.func @transform_2(%arg0: i32) -> (i32, i32) {
    %c0_i32 = arith.constant 0 : i32
    %c0_i32_0 = arith.constant 0 : i32
    %c0_i32_1 = arith.constant 0 : i32
    return %c0_i32, %c0_i32_0 : i32, i32
  }
  func.func @transform_3(%arg0: i32) -> (i32, i32) {
    %c0_i32 = arith.constant 0 : i32
    %c0_i32_0 = arith.constant 0 : i32
    %c0_i32_1 = arith.constant 0 : i32
    return %c0_i32, %c0_i32_0 : i32, i32
  }
  func.func @transform_4(%arg0: i32) -> (i32, i32) {
    %c0_i32 = arith.constant 0 : i32
    %c0_i32_0 = arith.constant 0 : i32
    %c0_i32_1 = arith.constant 0 : i32
    return %c0_i32, %c0_i32_0 : i32, i32
  }
  func.func @transform_5(%arg0: i32) -> (i32, i32) {
    %c0_i32 = arith.constant 0 : i32
    %c0_i32_0 = arith.constant 0 : i32
    %c0_i32_1 = arith.constant 0 : i32
    return %c0_i32, %c0_i32_0 : i32, i32
  }
  func.func @transform_6(%arg0: i32) -> (i32, i32) {
    %c0_i32 = arith.constant 0 : i32
    %c0_i32_0 = arith.constant 0 : i32
    %c0_i32_1 = arith.constant 0 : i32
    return %c0_i32, %c0_i32_0 : i32, i32
  }
  func.func @transform_7(%arg0: i32) -> (i32, i32) {
    %c0_i32 = arith.constant 0 : i32
    %c0_i32_0 = arith.constant 0 : i32
    return %c0_i32, %arg0 : i32, i32
  }
}

</mosaic_0001>

<llo_original>
// kernel: actor_critic_forward.1
$region0: #{actor_critic_forward.1}
  #allocation0 [shape = 'u32[]', space=smem, size = 0x4, offset = 0x4, fixed_abs, tag = 'smem constant byte address 0x4 - core index']
  #allocation1 [shape = 'u32[144,128]{1,0:T(1,128)}', space=vmem, size = 0x12000, scoped, tag = 'internal scratch']
  %s0 = inlined_call_operand.vmem [shape: f32[4,128], index: 0, kind: input, shape index: {}]
  %s1 = inlined_call_operand.vmem [shape: f32[32,4], index: 1, kind: input, shape index: {}]
  %s2 = inlined_call_operand.vmem [shape: f32[32,1], index: 2, kind: input, shape index: {}]
  %s3 = inlined_call_operand.vmem [shape: f32[16,32], index: 3, kind: input, shape index: {}]
  %s4 = inlined_call_operand.vmem [shape: f32[16,1], index: 4, kind: input, shape index: {}]
  %s5 = inlined_call_operand.vmem [shape: f32[5,16], index: 5, kind: input, shape index: {}]
  %s6 = inlined_call_operand.vmem [shape: f32[5,1], index: 6, kind: input, shape index: {}]
  %s7 = inlined_call_operand.vmem [shape: f32[5,128], index: 7, kind: output, shape index: {}]
  %s8 = sld [smem:[#allocation0]]
  $region38: #{actor_critic_forward.1} parent=0
    _
  %s10 = ssub.s32 1, %s8
  %s11 = scalar_select 0, %s10, %s8
  // Predicated region
  $region2: #{actor_critic_forward.1} parent=0 // pred_check
    _
  $region3: #{actor_critic_forward.1} parent=0 // pred_check_branch
    %13 = sbr.rel (0) target = $region5
  $region4: #{actor_critic_forward.1} parent=0 // pred_region
    _
  $region5: #{actor_critic_forward.1} parent=0 // pred_fallthru
    _
  // Predicated region
  $region6: #{actor_critic_forward.1} parent=0 // pred_check
    _
  $region7: #{actor_critic_forward.1} parent=0 // pred_check_branch
    %15 = sbr.rel (0) target = $region9
  $region8: #{actor_critic_forward.1} parent=0 // pred_region
    _
  $region9: #{actor_critic_forward.1} parent=0 // pred_fallthru
    _
  // Predicated region
  $region10: #{actor_critic_forward.1} parent=0 // pred_check
    _
  $region11: #{actor_critic_forward.1} parent=0 // pred_check_branch
    %17 = sbr.rel (0) target = $region13
  $region12: #{actor_critic_forward.1} parent=0 // pred_region
    _
  $region13: #{actor_critic_forward.1} parent=0 // pred_fallthru
    _
  // Predicated region
  $region14: #{actor_critic_forward.1} parent=0 // pred_check
    _
  $region15: #{actor_critic_forward.1} parent=0 // pred_check_branch
    %19 = sbr.rel (0) target = $region17
  $region16: #{actor_critic_forward.1} parent=0 // pred_region
    _
  $region17: #{actor_critic_forward.1} parent=0 // pred_fallthru
    _
  // Predicated region
  $region18: #{actor_critic_forward.1} parent=0 // pred_check
    _
  $region19: #{actor_critic_forward.1} parent=0 // pred_check_branch
    %21 = sbr.rel (0) target = $region21
  $region20: #{actor_critic_forward.1} parent=0 // pred_region
    _
  $region21: #{actor_critic_forward.1} parent=0 // pred_fallthru
    _
  // Predicated region
  $region22: #{actor_critic_forward.1} parent=0 // pred_check
    _
  $region23: #{actor_critic_forward.1} parent=0 // pred_check_branch
    %23 = sbr.rel (0) target = $region25
  $region24: #{actor_critic_forward.1} parent=0 // pred_region
    _
  $region25: #{actor_critic_forward.1} parent=0 // pred_fallthru
    _
  // Predicated region
  $region26: #{actor_critic_forward.1} parent=0 // pred_check
    _
  $region27: #{actor_critic_forward.1} parent=0 // pred_check_branch
    %25 = sbr.rel (0) target = $region29
  $region28: #{actor_critic_forward.1} parent=0 // pred_region
    _
  $region29: #{actor_critic_forward.1} parent=0 // pred_fallthru
    _
  %v26 = vld [vmem:[%s0] sm:$0xf]
  %v27 = vld [vmem:[%s1] sm:$0xff]
  %v28 = vld [vmem:[%s1 + $0x8] sm:$0xff]
  %v29 = vld [vmem:[%s1 + $0x10] sm:$0xff]
  %v30 = vld [vmem:[%s1 + $0x18] sm:$0xff]
  %v31 = vld [vmem:[%s2] sm:$0xff]
  %v32 = vld [vmem:[%s2 + $0x8] sm:$0xff]
  %v33 = vld [vmem:[%s2 + $0x10] sm:$0xff]
  %v34 = vld [vmem:[%s2 + $0x18] sm:$0xff]
  %36 = vset.pattern.permute.xlu0 0
  %37 = vperm.xlu0 %36, %v31
  %v38 = vpop.permute.xlu0 %37
  %41 = vset.pattern.permute.xlu0 0
  %42 = vperm.xlu0 %41, %v32
  %v43 = vpop.permute.xlu0 %42
  %46 = vset.pattern.permute.xlu0 0
  %47 = vperm.xlu0 %46, %v33
  %v48 = vpop.permute.xlu0 %47
  %51 = vset.pattern.permute.xlu0 0
  %52 = vperm.xlu0 %51, %v34
  %v53 = vpop.permute.xlu0 %52
  %vm55 = vcmask 31744
  %v57 = vsel %vm55, %v27, 0
  %v60 = vsel %vm55, %v28, 0
  %v63 = vsel %vm55, %v29, 0
  %v66 = vsel %vm55, %v30, 0
  %vm68 = vcmask 1043456
  %v70 = vsel %vm68, %v26, 0
  %72 = vmatprep.subr.mxu0 0.0
  %73 = vmatpush1.msra.mxu0 %v70
  %74 = vmatprep.subr.mxu0 0.0
  %75 = vmatpush1.msra.mxu0 0.0
  %76 = vmatprep.subr.mxu0 0.0
  %77 = vmatpush1.msra.mxu0 0.0
  %78 = vmatprep.subr.mxu0 0.0
  %79 = vmatpush1.msra.mxu0 0.0
  %80 = vmatprep.subr.mxu0 0.0
  %81 = vmatpush1.msra.mxu0 0.0
  %82 = vmatprep.subr.mxu0 0.0
  %83 = vmatpush1.msra.mxu0 0.0
  %84 = vmatprep.subr.mxu0 0.0
  %85 = vmatpush1.msra.mxu0 0.0
  %86 = vmatprep.subr.mxu0 0.0
  %87 = vmatpush1.msra.mxu0 0.0
  %88 = vmatprep.subr.mxu0 0.0
  %89 = vmatpush1.msra.mxu0 0.0
  %90 = vmatprep.subr.mxu0 0.0
  %91 = vmatpush1.msra.mxu0 0.0
  %92 = vmatprep.subr.mxu0 0.0
  %93 = vmatpush1.msra.mxu0 0.0
  %94 = vmatprep.subr.mxu0 0.0
  %95 = vmatpush1.msra.mxu0 0.0
  %96 = vmatprep.subr.mxu0 0.0
  %97 = vmatpush1.msra.mxu0 0.0
  %98 = vmatprep.subr.mxu0 0.0
  %99 = vmatpush1.msra.mxu0 0.0
  %100 = vmatprep.subr.mxu0 0.0
  %101 = vmatpush1.msra.mxu0 0.0
  %102 = vmatprep.subr.mxu0 0.0
  %103 = vmatpush1.msra.mxu0 0.0
  %104 = vmatprep.subr.mxu0 0.0
  %105 = vmatpush1.msra.mxu0 0.0
  %106 = vmatprep.subr.mxu0 0.0
  %107 = vmatpush1.msra.mxu0 0.0
  %108 = vmatprep.subr.mxu0 0.0
  %109 = vmatpush1.msra.mxu0 0.0
  %110 = vmatprep.subr.mxu0 0.0
  %111 = vmatpush1.msra.mxu0 0.0
  %112 = vmatprep.subr.mxu0 0.0
  %113 = vmatpush1.msra.mxu0 0.0
  %114 = vmatprep.subr.mxu0 0.0
  %115 = vmatpush1.msra.mxu0 0.0
  %116 = vmatprep.subr.mxu0 0.0
  %117 = vmatpush1.msra.mxu0 0.0
  %118 = vmatprep.subr.mxu0 0.0
  %119 = vmatpush1.msra.mxu0 0.0
  %120 = vmatprep.subr.mxu0 0.0
  %121 = vmatpush1.msra.mxu0 0.0
  %122 = vmatprep.subr.mxu0 0.0
  %123 = vmatpush1.msra.mxu0 0.0
  %124 = vmatprep.subr.mxu0 0.0
  %125 = vmatpush1.msra.mxu0 0.0
  %126 = vmatprep.subr.mxu0 0.0
  %127 = vmatpush1.msra.mxu0 0.0
  %128 = vmatprep.subr.mxu0 0.0
  %129 = vmatpush1.msra.mxu0 0.0
  %130 = vmatprep.subr.mxu0 0.0
  %131 = vmatpush1.msra.mxu0 0.0
  %132 = vmatprep.subr.mxu0 0.0
  %133 = vmatpush1.msra.mxu0 0.0
  %134 = vmatprep.subr.mxu0 0.0
  %135 = vmatpush1.msra.mxu0 0.0
  %136 = vmatprep.mubr.f32.mxu0 0.0
  %137 = vmatmul.mubr.f32.gmra.mrb[0].mxu0 %v57
  %v138 = vpop.f32.mrb[0].mxu0
  %v139 = vadd.f32 %v38, %v138
  %v140 = vpop.f32.mrb[0].mxu0
  %141 = vmatprep.mubr.f32.mxu0 0.0
  %142 = vmatmul.mubr.f32.gmra.mrb[0].mxu0 %v60
  %v143 = vpop.f32.mrb[0].mxu0
  %v144 = vadd.f32 %v43, %v143
  %v145 = vpop.f32.mrb[0].mxu0
  %146 = vmatprep.mubr.f32.mxu0 0.0
  %147 = vmatmul.mubr.f32.gmra.mrb[0].mxu0 %v63
  %v148 = vpop.f32.mrb[0].mxu0
  %v149 = vadd.f32 %v48, %v148
  %v150 = vpop.f32.mrb[0].mxu0
  %151 = vmatprep.mubr.f32.mxu0 0.0
  %152 = vmatmul.mubr.f32.gmra.mrb[0].mxu0 %v66
  %v153 = vpop.f32.mrb[0].mxu0
  %v154 = vadd.f32 %v53, %v153
  %v155 = vpop.f32.mrb[0].mxu0
  %156 = vdwg.mxu0
  %v157 = vmax.f32 %v139, 0.0
  %v158 = vmax.f32 %v144, 0.0
  %v159 = vmax.f32 %v149, 0.0
  %v160 = vmax.f32 %v154, 0.0
  %v161 = vld [vmem:[%s3] sm:$0xff]
  %v162 = vld [vmem:[%s3 + $0x8] sm:$0xff]
  %v163 = vld [vmem:[%s4] sm:$0xff]
  %v164 = vld [vmem:[%s4 + $0x8] sm:$0xff]
  %166 = vset.pattern.permute.xlu0 0
  %167 = vperm.xlu0 %166, %v163
  %v168 = vpop.permute.xlu0 %167
  %171 = vset.pattern.permute.xlu0 0
  %172 = vperm.xlu0 %171, %v164
  %v173 = vpop.permute.xlu0 %172
  %vm175 = vcmask 261120
  %v177 = vsel %vm175, %v161, 0
  %v180 = vsel %vm175, %v162, 0
  %182 = vmatprep.subr.mxu0 0.0
  %183 = vmatpush1.msra.mxu0 %v157
  %184 = vmatprep.subr.mxu0 0.0
  %185 = vmatpush1.msra.mxu0 %v158
  %186 = vmatprep.subr.mxu0 0.0
  %187 = vmatpush1.msra.mxu0 %v159
  %188 = vmatprep.subr.mxu0 0.0
  %189 = vmatpush1.msra.mxu0 %v160
  %190 = vmatprep.subr.mxu0 0.0
  %191 = vmatpush1.msra.mxu0 0.0
  %192 = vmatprep.subr.mxu0 0.0
  %193 = vmatpush1.msra.mxu0 0.0
  %194 = vmatprep.subr.mxu0 0.0
  %195 = vmatpush1.msra.mxu0 0.0
  %196 = vmatprep.subr.mxu0 0.0
  %197 = vmatpush1.msra.mxu0 0.0
  %198 = vmatprep.subr.mxu0 0.0
  %199 = vmatpush1.msra.mxu0 0.0
  %200 = vmatprep.subr.mxu0 0.0
  %201 = vmatpush1.msra.mxu0 0.0
  %202 = vmatprep.subr.mxu0 0.0
  %203 = vmatpush1.msra.mxu0 0.0
  %204 = vmatprep.subr.mxu0 0.0
  %205 = vmatpush1.msra.mxu0 0.0
  %206 = vmatprep.subr.mxu0 0.0
  %207 = vmatpush1.msra.mxu0 0.0
  %208 = vmatprep.subr.mxu0 0.0
  %209 = vmatpush1.msra.mxu0 0.0
  %210 = vmatprep.subr.mxu0 0.0
  %211 = vmatpush1.msra.mxu0 0.0
  %212 = vmatprep.subr.mxu0 0.0
  %213 = vmatpush1.msra.mxu0 0.0
  %214 = vmatprep.subr.mxu0 0.0
  %215 = vmatpush1.msra.mxu0 0.0
  %216 = vmatprep.subr.mxu0 0.0
  %217 = vmatpush1.msra.mxu0 0.0
  %218 = vmatprep.subr.mxu0 0.0
  %219 = vmatpush1.msra.mxu0 0.0
  %220 = vmatprep.subr.mxu0 0.0
  %221 = vmatpush1.msra.mxu0 0.0
  %222 = vmatprep.subr.mxu0 0.0
  %223 = vmatpush1.msra.mxu0 0.0
  %224 = vmatprep.subr.mxu0 0.0
  %225 = vmatpush1.msra.mxu0 0.0
  %226 = vmatprep.subr.mxu0 0.0
  %227 = vmatpush1.msra.mxu0 0.0
  %228 = vmatprep.subr.mxu0 0.0
  %229 = vmatpush1.msra.mxu0 0.0
  %230 = vmatprep.subr.mxu0 0.0
  %231 = vmatpush1.msra.mxu0 0.0
  %232 = vmatprep.subr.mxu0 0.0
  %233 = vmatpush1.msra.mxu0 0.0
  %234 = vmatprep.subr.mxu0 0.0
  %235 = vmatpush1.msra.mxu0 0.0
  %236 = vmatprep.subr.mxu0 0.0
  %237 = vmatpush1.msra.mxu0 0.0
  %238 = vmatprep.subr.mxu0 0.0
  %239 = vmatpush1.msra.mxu0 0.0
  %240 = vmatprep.subr.mxu0 0.0
  %241 = vmatpush1.msra.mxu0 0.0
  %242 = vmatprep.subr.mxu0 0.0
  %243 = vmatpush1.msra.mxu0 0.0
  %244 = vmatprep.subr.mxu0 0.0
  %245 = vmatpush1.msra.mxu0 0.0
  %246 = vmatprep.mubr.f32.mxu0 0.0
  %247 = vmatmul.mubr.f32.gmra.mrb[0].mxu0 %v177
  %v248 = vpop.f32.mrb[0].mxu0
  %v249 = vadd.f32 %v168, %v248
  %v250 = vpop.f32.mrb[0].mxu0
  %251 = vmatprep.mubr.f32.mxu0 0.0
  %252 = vmatmul.mubr.f32.gmra.mrb[0].mxu0 %v180
  %v253 = vpop.f32.mrb[0].mxu0
  %v254 = vadd.f32 %v173, %v253
  %v255 = vpop.f32.mrb[0].mxu0
  %256 = vdwg.mxu0
  %v257 = vmax.f32 %v249, 0.0
  %v258 = vmax.f32 %v254, 0.0
  %v259 = vld [vmem:[%s5] sm:$0x1f]
  %v260 = vld [vmem:[%s6] sm:$0x1f]
  %262 = vset.pattern.permute.xlu0 0
  %263 = vperm.xlu0 %262, %v260
  %v264 = vpop.permute.xlu0 %263
  %vm266 = vcmask 130048
  %v268 = vsel %vm266, %v259, 0
  %270 = vmatprep.subr.mxu0 0.0
  %271 = vmatpush1.msra.mxu0 %v257
  %272 = vmatprep.subr.mxu0 0.0
  %273 = vmatpush1.msra.mxu0 %v258
  %274 = vmatprep.subr.mxu0 0.0
  %275 = vmatpush1.msra.mxu0 0.0
  %276 = vmatprep.subr.mxu0 0.0
  %277 = vmatpush1.msra.mxu0 0.0
  %278 = vmatprep.subr.mxu0 0.0
  %279 = vmatpush1.msra.mxu0 0.0
  %280 = vmatprep.subr.mxu0 0.0
  %281 = vmatpush1.msra.mxu0 0.0
  %282 = vmatprep.subr.mxu0 0.0
  %283 = vmatpush1.msra.mxu0 0.0
  %284 = vmatprep.subr.mxu0 0.0
  %285 = vmatpush1.msra.mxu0 0.0
  %286 = vmatprep.subr.mxu0 0.0
  %287 = vmatpush1.msra.mxu0 0.0
  %288 = vmatprep.subr.mxu0 0.0
  %289 = vmatpush1.msra.mxu0 0.0
  %290 = vmatprep.subr.mxu0 0.0
  %291 = vmatpush1.msra.mxu0 0.0
  %292 = vmatprep.subr.mxu0 0.0
  %293 = vmatpush1.msra.mxu0 0.0
  %294 = vmatprep.subr.mxu0 0.0
  %295 = vmatpush1.msra.mxu0 0.0
  %296 = vmatprep.subr.mxu0 0.0
  %297 = vmatpush1.msra.mxu0 0.0
  %298 = vmatprep.subr.mxu0 0.0
  %299 = vmatpush1.msra.mxu0 0.0
  %300 = vmatprep.subr.mxu0 0.0
  %301 = vmatpush1.msra.mxu0 0.0
  %302 = vmatprep.subr.mxu0 0.0
  %303 = vmatpush1.msra.mxu0 0.0
  %304 = vmatprep.subr.mxu0 0.0
  %305 = vmatpush1.msra.mxu0 0.0
  %306 = vmatprep.subr.mxu0 0.0
  %307 = vmatpush1.msra.mxu0 0.0
  %308 = vmatprep.subr.mxu0 0.0
  %309 = vmatpush1.msra.mxu0 0.0
  %310 = vmatprep.subr.mxu0 0.0
  %311 = vmatpush1.msra.mxu0 0.0
  %312 = vmatprep.subr.mxu0 0.0
  %313 = vmatpush1.msra.mxu0 0.0
  %314 = vmatprep.subr.mxu0 0.0
  %315 = vmatpush1.msra.mxu0 0.0
  %316 = vmatprep.subr.mxu0 0.0
  %317 = vmatpush1.msra.mxu0 0.0
  %318 = vmatprep.subr.mxu0 0.0
  %319 = vmatpush1.msra.mxu0 0.0
  %320 = vmatprep.subr.mxu0 0.0
  %321 = vmatpush1.msra.mxu0 0.0
  %322 = vmatprep.subr.mxu0 0.0
  %323 = vmatpush1.msra.mxu0 0.0
  %324 = vmatprep.subr.mxu0 0.0
  %325 = vmatpush1.msra.mxu0 0.0
  %326 = vmatprep.subr.mxu0 0.0
  %327 = vmatpush1.msra.mxu0 0.0
  %328 = vmatprep.subr.mxu0 0.0
  %329 = vmatpush1.msra.mxu0 0.0
  %330 = vmatprep.subr.mxu0 0.0
  %331 = vmatpush1.msra.mxu0 0.0
  %332 = vmatprep.subr.mxu0 0.0
  %333 = vmatpush1.msra.mxu0 0.0
  %334 = vmatprep.mubr.f32.mxu0 0.0
  %335 = vmatmul.mubr.f32.gmra.mrb[0].mxu0 %v268
  %v336 = vpop.f32.mrb[0].mxu0
  %v337 = vadd.f32 %v264, %v336
  %v338 = vpop.f32.mrb[0].mxu0
  %339 = vdwg.mxu0
  %340 = vst [vmem:[%s7] sm:$0x1f] %v337
  // Predicated region
  $region30: #{actor_critic_forward.1} parent=0 // pred_check
    _
  $region31: #{actor_critic_forward.1} parent=0 // pred_check_branch
    %342 = sbr.rel (0) target = $region33
  $region32: #{actor_critic_forward.1} parent=0 // pred_region
    _
  $region33: #{actor_critic_forward.1} parent=0 // pred_fallthru
    _
  // Predicated region
  $region34: #{actor_critic_forward.1} parent=0 // pred_check
    _
  $region35: #{actor_critic_forward.1} parent=0 // pred_check_branch
    %344 = sbr.rel (0) target = $region37
  $region36: #{actor_critic_forward.1} parent=0 // pred_region
    _
  $region37: #{actor_critic_forward.1} parent=0 // pred_fallthru
    _

</llo_original>
